<compile_context>
chip_gen: v7x
topology: tpu7x:2x2x1
jax: 0.10.0
libtpu: 0.0.40
codegen_flags: <defaults>
</compile_context>

<pallas_src>
import jax
import jax.numpy as jnp
from jax.experimental import pallas as pl
from jax.experimental.pallas import tpu as pltpu


def _round_up(x: int, m: int) -> int:
    return ((x + m - 1) // m) * m


def _tpu_generation() -> int:
    """Best-effort TPU generation from device_kind; 0 if unknown."""
    try:
        kind = jax.devices()[0].device_kind.lower()
    except Exception:
        return 0
    for g in (7, 6, 5, 4, 3, 2):
        if f"v{g}" in kind:
            return g
    return 0


# ---------------------------------------------------------------------------
# Kernel: one (TILE_N, :) row tile of   sigmoid(relu(z @ W1 + b1) @ W2 + b2)
# ---------------------------------------------------------------------------
def _decoder_kernel(z_ref, w1_ref, b1_ref, w2_ref, b2_ref, out_ref):
    z = z_ref[...]                                           # (tile, K) f32

    # layer 1: bf16 MXU matmul, f32 accumulation; hidden padded to 128 lanes
    h = jnp.dot(z.astype(w1_ref.dtype), w1_ref[...],
                preferred_element_type=jnp.float32) + b1_ref[...]
    h = jnp.maximum(h, 0.0)                                  # ReLU (VPU)

    # layer 2: bf16 MXU matmul, f32 accumulation; output width = true out_size
    o = jnp.dot(h.astype(w2_ref.dtype), w2_ref[...],
                preferred_element_type=jnp.float32) + b2_ref[...]

    # sigmoid in the output dtype: bf16 EUP on v6e/v7x, f32 on v5e and older
    out_ref[...] = jax.nn.sigmoid(o.astype(out_ref.dtype))


# ---------------------------------------------------------------------------
# Parameters (deterministic stand-in for PyTorch Linear init; weight stored as
# (in, out) so the kernel computes x @ W + b directly).
# ---------------------------------------------------------------------------
def _linear_init(key, fan_in, fan_out):
    kw, kb = jax.random.split(key)
    bound = 1.0 / jnp.sqrt(fan_in)
    w = jax.random.uniform(kw, (fan_in, fan_out), jnp.float32, -bound, bound)
    b = jax.random.uniform(kb, (1, fan_out), jnp.float32, -bound, bound)
    return w, b


def init_decoder_params(key, z_dim, output_size):
    h = 2 * z_dim
    k1, k2 = jax.random.split(key)
    w1, b1 = _linear_init(k1, h, h)
    w2, b2 = _linear_init(k2, h, output_size)
    return dict(w1=w1, b1=b1, w2=w2, b2=b2)


def pack_decoder_params(params):
    """Pad the hidden dim to a multiple of 128 lanes (VMEM-only intermediate);
    the OUTPUT dim is left unpadded. Weights cast to bf16 (MXU-native),
    biases / accumulation stay f32. Zero padding contributes exactly zero."""
    w1, b1, w2, b2 = params["w1"], params["b1"], params["w2"], params["b2"]
    k, h = w1.shape
    out = w2.shape[1]
    hp = _round_up(h, 128)

    w1p = jnp.zeros((k, hp), jnp.float32).at[:, :h].set(w1).astype(jnp.bfloat16)
    b1p = jnp.zeros((1, hp), jnp.float32).at[:, :h].set(b1)
    w2p = jnp.zeros((hp, out), jnp.float32).at[:h, :].set(w2).astype(jnp.bfloat16)
    b2p = b2                                                  # (1, out) f32, unpadded
    return dict(w1=w1p, b1=b1p, w2=w2p, b2=b2p)


# ---------------------------------------------------------------------------
# Row-tile selection: tile divides round_up(n, 8) so no large jnp.pad pass,
# and the grid has >= min_steps steps (2 on v7x to feed both TensorCores).
# ---------------------------------------------------------------------------
def _choose_tiling(n, max_tile, min_steps):
    n8 = _round_up(max(n, 8), 8)
    steps = max(min_steps, pl.cdiv(n8, max_tile))
    tile = _round_up(pl.cdiv(n8, steps), 8)
    steps = pl.cdiv(n8, tile)
    n_pad = tile * steps          # n_pad - n < 8 * steps (usually 0)
    return tile, steps, n_pad


# ---------------------------------------------------------------------------
# Wrapper: row-tiled pallas_call
# ---------------------------------------------------------------------------
def decoder_forward(packed, z, tile_n=8192):
    n, k = z.shape
    hp = packed["w1"].shape[1]            # padded hidden (multiple of 128)
    out_size = packed["w2"].shape[1]      # true output width (unpadded)

    gen = _tpu_generation()
    out_dtype = jnp.bfloat16 if gen >= 6 else jnp.float32   # bf16 EUP/writeback on v6e/v7x
    min_steps = 2 if gen >= 7 else 1                        # keep both v7x TCs busy

    tile, steps, n_pad = _choose_tiling(n, tile_n, min_steps)
    if n_pad != n:
        # Only a handful of rows (< 8 * steps); avoided entirely when n is a
        # multiple of 8 and the chosen step count divides it.
        z = jnp.pad(z, ((0, n_pad - n), (0, 0)))

    out_bytes = jnp.dtype(out_dtype).itemsize
    cost = pl.CostEstimate(
        flops=2 * n_pad * k * hp + 2 * n_pad * hp * out_size,
        transcendentals=n_pad * out_size,
        bytes_accessed=(n_pad * k * 4                         # z in (f32)
                        + n_pad * out_size * out_bytes        # out
                        + packed["w1"].size * 2 + packed["w2"].size * 2
                        + (hp + out_size) * 4),
    )

    out = pl.pallas_call(
        _decoder_kernel,
        out_shape=jax.ShapeDtypeStruct((n_pad, out_size), out_dtype),
        grid=(steps,),
        in_specs=[
            pl.BlockSpec((tile, k), lambda i: (i, 0)),        # z: row-tiled, pipelined
            pl.BlockSpec((k, hp), lambda i: (0, 0)),          # W1: VMEM-resident
            pl.BlockSpec((1, hp), lambda i: (0, 0)),          # b1: VMEM-resident
            pl.BlockSpec((hp, out_size), lambda i: (0, 0)),   # W2: VMEM-resident
            pl.BlockSpec((1, out_size), lambda i: (0, 0)),    # b2: VMEM-resident
        ],
        out_specs=pl.BlockSpec((tile, out_size), lambda i: (i, 0)),
        compiler_params=pltpu.CompilerParams(
            dimension_semantics=("parallel",)),
        cost_estimate=cost,
    )(z, packed["w1"], packed["b1"], packed["w2"], packed["b2"])

    if n_pad != n:
        out = out[:n]
    return out


# ---------------------------------------------------------------------------
# Pure-JAX reference (f32, unpadded) for correctness checking
# ---------------------------------------------------------------------------
def decoder_reference(params, z):
    h = jnp.maximum(z @ params["w1"] + params["b1"], 0.0)
    return jax.nn.sigmoid(h @ params["w2"] + params["b2"])


if __name__ == "__main__":
    key = jax.random.PRNGKey(0)
    kz, kp = jax.random.split(key)

    Z_DIM = 16            # decoder input / hidden width = 2 * z_dim = 32
    OUT_SIZE = 64         # decoder output features (unpadded in the kernel)
    N = 256               # batch of latent vectors (rows)

    z = jax.random.normal(kz, (N, 2 * Z_DIM), jnp.float32)
    params = init_decoder_params(kp, Z_DIM, OUT_SIZE)
    packed = pack_decoder_params(params)

    out = decoder_forward(packed, z)
    jax.block_until_ready(out)

    ref = decoder_reference(params, z)
    assert out.shape == (N, OUT_SIZE)
    assert bool(jnp.all(jnp.isfinite(out.astype(jnp.float32))))
    max_err = float(jnp.max(jnp.abs(out.astype(jnp.float32) - ref)))
    # bf16 weights (+ bf16 output on v6e/v7x) vs f32 reference
    tol = 2e-2 if out.dtype == jnp.float32 else 3e-2
    assert max_err < tol, f"max abs error vs f32 reference: {max_err}"
    print("KERNEL_OK")
</pallas_src>

<mosaic_0001>
module attributes {stable_mosaic.version = 11 : i64} {
  func.func @_decoder_kernel(%arg0: i32, %arg1: memref<256x32xf32, #tpu.memory_space<vmem>>, %arg2: memref<32x128xbf16, #tpu.memory_space<vmem>>, %arg3: memref<1x128xf32, #tpu.memory_space<vmem>>, %arg4: memref<128x64xbf16, #tpu.memory_space<vmem>>, %arg5: memref<1x64xf32, #tpu.memory_space<vmem>>, %arg6: memref<256x64xf32, #tpu.memory_space<vmem>>) attributes {dimension_semantics = [#tpu.dimension_semantics<parallel>], iteration_bounds = array<i64: 1>, scalar_prefetch = 0 : i64, scratch_operands = 0 : i64, tpu.core_type = #tpu.core_type<tc>, window_params = [{transform_indices = @transform_0, window_bounds = array<i64: 256, 32>}, {pipeline_mode = #tpu.pipeline_mode<synchronous>, transform_indices = @transform_1, window_bounds = array<i64: 32, 128>}, {pipeline_mode = #tpu.pipeline_mode<synchronous>, transform_indices = @transform_2, window_bounds = array<i64: 1, 128>}, {pipeline_mode = #tpu.pipeline_mode<synchronous>, transform_indices = @transform_3, window_bounds = array<i64: 128, 64>}, {pipeline_mode = #tpu.pipeline_mode<synchronous>, transform_indices = @transform_4, window_bounds = array<i64: 1, 64>}, {transform_indices = @transform_5, window_bounds = array<i64: 256, 64>}]} {
    %c0 = arith.constant 0 : index
    %c0_0 = arith.constant 0 : index
    %0 = vector.load %arg1[%c0, %c0_0] : memref<256x32xf32, #tpu.memory_space<vmem>>, vector<256x32xf32>
    %1 = arith.truncf %0 : vector<256x32xf32> to vector<256x32xbf16>
    %c0_1 = arith.constant 0 : index
    %c0_2 = arith.constant 0 : index
    %2 = vector.load %arg2[%c0_1, %c0_2] : memref<32x128xbf16, #tpu.memory_space<vmem>>, vector<32x128xbf16>
    %cst = arith.constant dense<0.000000e+00> : vector<256x128xf32>
    %3 = tpu.matmul %1, %2, %cst {dimension_numbers = #tpu.dot_dimension_numbers<[1], [0], [0], [1], [0, 0, 1, 1], [], []>} : vector<256x32xbf16>, vector<32x128xbf16>, vector<256x128xf32> -> vector<256x128xf32>
    %c0_3 = arith.constant 0 : index
    %c0_4 = arith.constant 0 : index
    %4 = vector.load %arg3[%c0_3, %c0_4] : memref<1x128xf32, #tpu.memory_space<vmem>>, vector<1x128xf32>
    %5 = vector.broadcast %4 : vector<1x128xf32> to vector<256x128xf32>
    %6 = arith.addf %3, %5 : vector<256x128xf32>
    %cst_5 = arith.constant 0.000000e+00 : f32
    %7 = vector.broadcast %cst_5 : f32 to vector<256x128xf32>
    %8 = arith.maximumf %6, %7 : vector<256x128xf32>
    %9 = arith.truncf %8 : vector<256x128xf32> to vector<256x128xbf16>
    %c0_6 = arith.constant 0 : index
    %c0_7 = arith.constant 0 : index
    %10 = vector.load %arg4[%c0_6, %c0_7] : memref<128x64xbf16, #tpu.memory_space<vmem>>, vector<128x64xbf16>
    %cst_8 = arith.constant dense<0.000000e+00> : vector<256x64xf32>
    %11 = tpu.matmul %9, %10, %cst_8 {dimension_numbers = #tpu.dot_dimension_numbers<[1], [0], [0], [1], [0, 0, 1, 1], [], []>} : vector<256x128xbf16>, vector<128x64xbf16>, vector<256x64xf32> -> vector<256x64xf32>
    %c0_9 = arith.constant 0 : index
    %c0_10 = arith.constant 0 : index
    %12 = vector.load %arg5[%c0_9, %c0_10] : memref<1x64xf32, #tpu.memory_space<vmem>>, vector<1x64xf32>
    %13 = vector.broadcast %12 : vector<1x64xf32> to vector<256x64xf32>
    %14 = arith.addf %11, %13 : vector<256x64xf32>
    %15 = arith.negf %14 : vector<256x64xf32>
    %16 = math.exp %15 : vector<256x64xf32>
    %cst_11 = arith.constant 1.000000e+00 : f32
    %17 = vector.broadcast %cst_11 : f32 to vector<256x64xf32>
    %18 = arith.addf %17, %16 : vector<256x64xf32>
    %19 = arith.divf %17, %18 : vector<256x64xf32>
    %c0_12 = arith.constant 0 : index
    %c0_13 = arith.constant 0 : index
    %20 = vector.load %arg6[%c0_12, %c0_13] : memref<256x64xf32, #tpu.memory_space<vmem>>, vector<256x64xf32>
    tpu.vector_store %arg6[%c0_12, %c0_13], %19 {strides = array<i32>} : memref<256x64xf32, #tpu.memory_space<vmem>>, vector<256x64xf32>,
    return
  }
  func.func @transform_0(%arg0: i32) -> (i32, i32) {
    %c0_i32 = arith.constant 0 : i32
    %c0_i32_0 = arith.constant 0 : i32
    return %arg0, %c0_i32 : i32, i32
  }
  func.func @transform_1(%arg0: i32) -> (i32, i32) {
    %c0_i32 = arith.constant 0 : i32
    %c0_i32_0 = arith.constant 0 : i32
    %c0_i32_1 = arith.constant 0 : i32
    return %c0_i32, %c0_i32_0 : i32, i32
  }
  func.func @transform_2(%arg0: i32) -> (i32, i32) {
    %c0_i32 = arith.constant 0 : i32
    %c0_i32_0 = arith.constant 0 : i32
    %c0_i32_1 = arith.constant 0 : i32
    return %c0_i32, %c0_i32_0 : i32, i32
  }
  func.func @transform_3(%arg0: i32) -> (i32, i32) {
    %c0_i32 = arith.constant 0 : i32
    %c0_i32_0 = arith.constant 0 : i32
    %c0_i32_1 = arith.constant 0 : i32
    return %c0_i32, %c0_i32_0 : i32, i32
  }
  func.func @transform_4(%arg0: i32) -> (i32, i32) {
    %c0_i32 = arith.constant 0 : i32
    %c0_i32_0 = arith.constant 0 : i32
    %c0_i32_1 = arith.constant 0 : i32
    return %c0_i32, %c0_i32_0 : i32, i32
  }
  func.func @transform_5(%arg0: i32) -> (i32, i32) {
    %c0_i32 = arith.constant 0 : i32
    %c0_i32_0 = arith.constant 0 : i32
    return %arg0, %c0_i32 : i32, i32
  }
}

</mosaic_0001>

<llo_original>
// kernel: tpu_custom_call.1
$region0: #{tpu_custom_call.1}
  #allocation0 [shape = 'u32[]', space=smem, size = 0x4, offset = 0x4, fixed_abs, tag = 'smem constant byte address 0x4 - core index']
  #allocation1 [shape = 'u32[144,128]{1,0:T(1,128)}', space=vmem, size = 0x12000, scoped, tag = 'internal scratch']
  %s0 = inlined_call_operand.vmem [shape: f32[256,32], index: 0, kind: input, shape index: {}]
  %s1 = inlined_call_operand.vmem [shape: bf16[32,128], index: 1, kind: input, shape index: {}]
  %s2 = inlined_call_operand.vmem [shape: f32[1,128], index: 2, kind: input, shape index: {}]
  %s3 = inlined_call_operand.vmem [shape: bf16[128,64], index: 3, kind: input, shape index: {}]
  %s4 = inlined_call_operand.vmem [shape: f32[1,64], index: 4, kind: input, shape index: {}]
  %s5 = inlined_call_operand.vmem [shape: f32[256,64], index: 5, kind: output, shape index: {}]
  %s6 = sld [smem:[#allocation0]]
  $region30: #{tpu_custom_call.1} parent=0
    _
  %s8 = ssub.s32 1, %s6
  %s9 = scalar_select 0, %s8, %s6
  // Predicated region
  $region2: #{tpu_custom_call.1} parent=0 // pred_check
    _
  $region3: #{tpu_custom_call.1} parent=0 // pred_check_branch
    %11 = sbr.rel (0) target = $region5
  $region4: #{tpu_custom_call.1} parent=0 // pred_region
    _
  $region5: #{tpu_custom_call.1} parent=0 // pred_fallthru
    _
  // Predicated region
  $region6: #{tpu_custom_call.1} parent=0 // pred_check
    _
  $region7: #{tpu_custom_call.1} parent=0 // pred_check_branch
    %13 = sbr.rel (0) target = $region9
  $region8: #{tpu_custom_call.1} parent=0 // pred_region
    _
  $region9: #{tpu_custom_call.1} parent=0 // pred_fallthru
    _
  // Predicated region
  $region10: #{tpu_custom_call.1} parent=0 // pred_check
    _
  $region11: #{tpu_custom_call.1} parent=0 // pred_check_branch
    %15 = sbr.rel (0) target = $region13
  $region12: #{tpu_custom_call.1} parent=0 // pred_region
    _
  $region13: #{tpu_custom_call.1} parent=0 // pred_fallthru
    _
  // Predicated region
  $region14: #{tpu_custom_call.1} parent=0 // pred_check
    _
  $region15: #{tpu_custom_call.1} parent=0 // pred_check_branch
    %17 = sbr.rel (0) target = $region17
  $region16: #{tpu_custom_call.1} parent=0 // pred_region
    _
  $region17: #{tpu_custom_call.1} parent=0 // pred_fallthru
    _
  // Predicated region
  $region18: #{tpu_custom_call.1} parent=0 // pred_check
    _
  $region19: #{tpu_custom_call.1} parent=0 // pred_check_branch
    %19 = sbr.rel (0) target = $region21
  $region20: #{tpu_custom_call.1} parent=0 // pred_region
    _
  $region21: #{tpu_custom_call.1} parent=0 // pred_fallthru
    _
  %v21 = vld [vmem:[%s0] sm:$0xff]
  %v22 = vld [vmem:[%s0 + $0x8] sm:$0xff]
  %v23 = vld [vmem:[%s0 + $0x10] sm:$0xff]
  %v24 = vld [vmem:[%s0 + $0x18] sm:$0xff]
  %v25 = vld [vmem:[%s0 + $0x20] sm:$0xff]
  %v26 = vld [vmem:[%s0 + $0x28] sm:$0xff]
  %v27 = vld [vmem:[%s0 + $0x30] sm:$0xff]
  %v28 = vld [vmem:[%s0 + $0x38] sm:$0xff]
  %v29 = vld [vmem:[%s0 + $0x40] sm:$0xff]
  %v30 = vld [vmem:[%s0 + $0x48] sm:$0xff]
  %v31 = vld [vmem:[%s0 + $0x50] sm:$0xff]
  %v32 = vld [vmem:[%s0 + $0x58] sm:$0xff]
  %v33 = vld [vmem:[%s0 + $0x60] sm:$0xff]
  %v34 = vld [vmem:[%s0 + $0x68] sm:$0xff]
  %v35 = vld [vmem:[%s0 + $0x70] sm:$0xff]
  %v36 = vld [vmem:[%s0 + $0x78] sm:$0xff]
  %v37 = vld [vmem:[%s0 + $0x80] sm:$0xff]
  %v38 = vld [vmem:[%s0 + $0x88] sm:$0xff]
  %v39 = vld [vmem:[%s0 + $0x90] sm:$0xff]
  %v40 = vld [vmem:[%s0 + $0x98] sm:$0xff]
  %v41 = vld [vmem:[%s0 + $0xa0] sm:$0xff]
  %v42 = vld [vmem:[%s0 + $0xa8] sm:$0xff]
  %v43 = vld [vmem:[%s0 + $0xb0] sm:$0xff]
  %v44 = vld [vmem:[%s0 + $0xb8] sm:$0xff]
  %v45 = vld [vmem:[%s0 + $0xc0] sm:$0xff]
  %v46 = vld [vmem:[%s0 + $0xc8] sm:$0xff]
  %v47 = vld [vmem:[%s0 + $0xd0] sm:$0xff]
  %v48 = vld [vmem:[%s0 + $0xd8] sm:$0xff]
  %v49 = vld [vmem:[%s0 + $0xe0] sm:$0xff]
  %v50 = vld [vmem:[%s0 + $0xe8] sm:$0xff]
  %v51 = vld [vmem:[%s0 + $0xf0] sm:$0xff]
  %v52 = vld [vmem:[%s0 + $0xf8] sm:$0xff]
  %v53 = vpack.c.bf16 %v22, %v21
  %v54 = vpack.c.bf16 %v24, %v23
  %v55 = vpack.c.bf16 %v26, %v25
  %v56 = vpack.c.bf16 %v28, %v27
  %v57 = vpack.c.bf16 %v30, %v29
  %v58 = vpack.c.bf16 %v32, %v31
  %v59 = vpack.c.bf16 %v34, %v33
  %v60 = vpack.c.bf16 %v36, %v35
  %v61 = vpack.c.bf16 %v38, %v37
  %v62 = vpack.c.bf16 %v40, %v39
  %v63 = vpack.c.bf16 %v42, %v41
  %v64 = vpack.c.bf16 %v44, %v43
  %v65 = vpack.c.bf16 %v46, %v45
  %v66 = vpack.c.bf16 %v48, %v47
  %v67 = vpack.c.bf16 %v50, %v49
  %v68 = vpack.c.bf16 %v52, %v51
  %v69 = vld [vmem:[%s1] sm:$0xf]
  %v70 = vld [vmem:[%s1 + $0x4] sm:$0xf]
  %v71 = vld [vmem:[%s1 + $0x8] sm:$0xf]
  %v72 = vld [vmem:[%s1 + $0xc] sm:$0xf]
  %v73 = vld [vmem:[%s2] sm:$0x1]
  %v75 = vlaneseq
  %v76 = vshrl.u32 %v75, 7
  %v77 = vsub.s32 0, %v76
  %v78 = vrot.slane %v73, %v77
  %v84 = vunpack.c.l.b16 %v69
  %v85 = vunpack.c.l.b16 %v70
  %v86 = vunpack.c.l.b16 %v71
  %v87 = vunpack.c.l.b16 %v72
  %v88 = vpack.c.b16 %v85, %v84
  %v89 = vpack.c.b16 %v87, %v86
  %vm92 = vcmask 261120
  %v94 = vsel %vm92, %v53, 0
  %v97 = vsel %vm92, %v54, 0
  %v100 = vsel %vm92, %v55, 0
  %v103 = vsel %vm92, %v56, 0
  %v106 = vsel %vm92, %v57, 0
  %v109 = vsel %vm92, %v58, 0
  %v112 = vsel %vm92, %v59, 0
  %v115 = vsel %vm92, %v60, 0
  %v118 = vsel %vm92, %v61, 0
  %v121 = vsel %vm92, %v62, 0
  %v124 = vsel %vm92, %v63, 0
  %v127 = vsel %vm92, %v64, 0
  %v130 = vsel %vm92, %v65, 0
  %v133 = vsel %vm92, %v66, 0
  %v136 = vsel %vm92, %v67, 0
  %v139 = vsel %vm92, %v68, 0
  %141 = vmatprep.subr.bf16.mxu0 0
  %142 = vmatpush1.bf16.msra.mxu0 %v88
  %143 = vmatprep.subr.bf16.mxu0 0
  %144 = vmatpush1.bf16.msra.mxu0 %v89
  %145 = vmatprep.subr.bf16.mxu0 0
  %146 = vmatpush1.bf16.msra.mxu0 0
  %147 = vmatprep.subr.bf16.mxu0 0
  %148 = vmatpush1.bf16.msra.mxu0 0
  %149 = vmatprep.subr.bf16.mxu0 0
  %150 = vmatpush1.bf16.msra.mxu0 0
  %151 = vmatprep.subr.bf16.mxu0 0
  %152 = vmatpush1.bf16.msra.mxu0 0
  %153 = vmatprep.subr.bf16.mxu0 0
  %154 = vmatpush1.bf16.msra.mxu0 0
  %155 = vmatprep.subr.bf16.mxu0 0
  %156 = vmatpush1.bf16.msra.mxu0 0
  %157 = vmatprep.subr.bf16.mxu0 0
  %158 = vmatpush1.bf16.msra.mxu0 0
  %159 = vmatprep.subr.bf16.mxu0 0
  %160 = vmatpush1.bf16.msra.mxu0 0
  %161 = vmatprep.subr.bf16.mxu0 0
  %162 = vmatpush1.bf16.msra.mxu0 0
  %163 = vmatprep.subr.bf16.mxu0 0
  %164 = vmatpush1.bf16.msra.mxu0 0
  %165 = vmatprep.subr.bf16.mxu0 0
  %166 = vmatpush1.bf16.msra.mxu0 0
  %167 = vmatprep.subr.bf16.mxu0 0
  %168 = vmatpush1.bf16.msra.mxu0 0
  %169 = vmatprep.subr.bf16.mxu0 0
  %170 = vmatpush1.bf16.msra.mxu0 0
  %171 = vmatprep.subr.bf16.mxu0 0
  %172 = vmatpush1.bf16.msra.mxu0 0
  %173 = vmatprep.mubr.bf16.mxu0 0
  %174 = vmatmul.mubr.bf16.gmra.mrb[0].mxu0 %v94
  %v175 = vpop.f32.mrb[0].mxu0
  %v176 = vadd.f32 %v78, %v175
  %v177 = vpop.f32.mrb[0].mxu0
  %v178 = vpop.f32.mrb[0].mxu0
  %v179 = vadd.f32 %v78, %v178
  %v180 = vpop.f32.mrb[0].mxu0
  %181 = vmatprep.mubr.bf16.mxu0 0
  %182 = vmatmul.mubr.bf16.gmra.mrb[0].mxu0 %v97
  %v183 = vpop.f32.mrb[0].mxu0
  %v184 = vadd.f32 %v78, %v183
  %v185 = vpop.f32.mrb[0].mxu0
  %v186 = vpop.f32.mrb[0].mxu0
  %v187 = vadd.f32 %v78, %v186
  %v188 = vpop.f32.mrb[0].mxu0
  %189 = vmatprep.mubr.bf16.mxu0 0
  %190 = vmatmul.mubr.bf16.gmra.mrb[0].mxu0 %v100
  %v191 = vpop.f32.mrb[0].mxu0
  %v192 = vadd.f32 %v78, %v191
  %v193 = vpop.f32.mrb[0].mxu0
  %v194 = vpop.f32.mrb[0].mxu0
  %v195 = vadd.f32 %v78, %v194
  %v196 = vpop.f32.mrb[0].mxu0
  %197 = vmatprep.mubr.bf16.mxu0 0
  %198 = vmatmul.mubr.bf16.gmra.mrb[0].mxu0 %v103
  %v199 = vpop.f32.mrb[0].mxu0
  %v200 = vadd.f32 %v78, %v199
  %v201 = vpop.f32.mrb[0].mxu0
  %v202 = vpop.f32.mrb[0].mxu0
  %v203 = vadd.f32 %v78, %v202
  %v204 = vpop.f32.mrb[0].mxu0
  %205 = vmatprep.mubr.bf16.mxu0 0
  %206 = vmatmul.mubr.bf16.gmra.mrb[0].mxu0 %v106
  %v207 = vpop.f32.mrb[0].mxu0
  %v208 = vadd.f32 %v78, %v207
  %v209 = vpop.f32.mrb[0].mxu0
  %v210 = vpop.f32.mrb[0].mxu0
  %v211 = vadd.f32 %v78, %v210
  %v212 = vpop.f32.mrb[0].mxu0
  %213 = vmatprep.mubr.bf16.mxu0 0
  %214 = vmatmul.mubr.bf16.gmra.mrb[0].mxu0 %v109
  %v215 = vpop.f32.mrb[0].mxu0
  %v216 = vadd.f32 %v78, %v215
  %v217 = vpop.f32.mrb[0].mxu0
  %v218 = vpop.f32.mrb[0].mxu0
  %v219 = vadd.f32 %v78, %v218
  %v220 = vpop.f32.mrb[0].mxu0
  %221 = vmatprep.mubr.bf16.mxu0 0
  %222 = vmatmul.mubr.bf16.gmra.mrb[0].mxu0 %v112
  %v223 = vpop.f32.mrb[0].mxu0
  %v224 = vadd.f32 %v78, %v223
  %v225 = vpop.f32.mrb[0].mxu0
  %v226 = vpop.f32.mrb[0].mxu0
  %v227 = vadd.f32 %v78, %v226
  %v228 = vpop.f32.mrb[0].mxu0
  %229 = vmatprep.mubr.bf16.mxu0 0
  %230 = vmatmul.mubr.bf16.gmra.mrb[0].mxu0 %v115
  %v231 = vpop.f32.mrb[0].mxu0
  %v232 = vadd.f32 %v78, %v231
  %v233 = vpop.f32.mrb[0].mxu0
  %v234 = vpop.f32.mrb[0].mxu0
  %v235 = vadd.f32 %v78, %v234
  %v236 = vpop.f32.mrb[0].mxu0
  %237 = vmatprep.mubr.bf16.mxu0 0
  %238 = vmatmul.mubr.bf16.gmra.mrb[0].mxu0 %v118
  %v239 = vpop.f32.mrb[0].mxu0
  %v240 = vadd.f32 %v78, %v239
  %v241 = vpop.f32.mrb[0].mxu0
  %v242 = vpop.f32.mrb[0].mxu0
  %v243 = vadd.f32 %v78, %v242
  %v244 = vpop.f32.mrb[0].mxu0
  %245 = vmatprep.mubr.bf16.mxu0 0
  %246 = vmatmul.mubr.bf16.gmra.mrb[0].mxu0 %v121
  %v247 = vpop.f32.mrb[0].mxu0
  %v248 = vadd.f32 %v78, %v247
  %v249 = vpop.f32.mrb[0].mxu0
  %v250 = vpop.f32.mrb[0].mxu0
  %v251 = vadd.f32 %v78, %v250
  %v252 = vpop.f32.mrb[0].mxu0
  %253 = vmatprep.mubr.bf16.mxu0 0
  %254 = vmatmul.mubr.bf16.gmra.mrb[0].mxu0 %v124
  %v255 = vpop.f32.mrb[0].mxu0
  %v256 = vadd.f32 %v78, %v255
  %v257 = vpop.f32.mrb[0].mxu0
  %v258 = vpop.f32.mrb[0].mxu0
  %v259 = vadd.f32 %v78, %v258
  %v260 = vpop.f32.mrb[0].mxu0
  %261 = vmatprep.mubr.bf16.mxu0 0
  %262 = vmatmul.mubr.bf16.gmra.mrb[0].mxu0 %v127
  %v263 = vpop.f32.mrb[0].mxu0
  %v264 = vadd.f32 %v78, %v263
  %v265 = vpop.f32.mrb[0].mxu0
  %v266 = vpop.f32.mrb[0].mxu0
  %v267 = vadd.f32 %v78, %v266
  %v268 = vpop.f32.mrb[0].mxu0
  %269 = vmatprep.mubr.bf16.mxu0 0
  %270 = vmatmul.mubr.bf16.gmra.mrb[0].mxu0 %v130
  %v271 = vpop.f32.mrb[0].mxu0
  %v272 = vadd.f32 %v78, %v271
  %v273 = vpop.f32.mrb[0].mxu0
  %v274 = vpop.f32.mrb[0].mxu0
  %v275 = vadd.f32 %v78, %v274
  %v276 = vpop.f32.mrb[0].mxu0
  %277 = vmatprep.mubr.bf16.mxu0 0
  %278 = vmatmul.mubr.bf16.gmra.mrb[0].mxu0 %v133
  %v279 = vpop.f32.mrb[0].mxu0
  %v280 = vadd.f32 %v78, %v279
  %v281 = vpop.f32.mrb[0].mxu0
  %v282 = vpop.f32.mrb[0].mxu0
  %v283 = vadd.f32 %v78, %v282
  %v284 = vpop.f32.mrb[0].mxu0
  %285 = vmatprep.mubr.bf16.mxu0 0
  %286 = vmatmul.mubr.bf16.gmra.mrb[0].mxu0 %v136
  %v287 = vpop.f32.mrb[0].mxu0
  %v288 = vadd.f32 %v78, %v287
  %v289 = vpop.f32.mrb[0].mxu0
  %v290 = vpop.f32.mrb[0].mxu0
  %v291 = vadd.f32 %v78, %v290
  %v292 = vpop.f32.mrb[0].mxu0
  %293 = vmatprep.mubr.bf16.mxu0 0
  %294 = vmatmul.mubr.bf16.gmra.mrb[0].mxu0 %v139
  %v295 = vpop.f32.mrb[0].mxu0
  %v296 = vadd.f32 %v78, %v295
  %v297 = vpop.f32.mrb[0].mxu0
  %v298 = vpop.f32.mrb[0].mxu0
  %v299 = vadd.f32 %v78, %v298
  %v300 = vpop.f32.mrb[0].mxu0
  %301 = vdwg.mxu0
  %v302 = vmax.f32 %v176, 0.0
  %v303 = vmax.f32 %v179, 0.0
  %v304 = vmax.f32 %v184, 0.0
  %v305 = vmax.f32 %v187, 0.0
  %v306 = vmax.f32 %v192, 0.0
  %v307 = vmax.f32 %v195, 0.0
  %v308 = vmax.f32 %v200, 0.0
  %v309 = vmax.f32 %v203, 0.0
  %v310 = vmax.f32 %v208, 0.0
  %v311 = vmax.f32 %v211, 0.0
  %v312 = vmax.f32 %v216, 0.0
  %v313 = vmax.f32 %v219, 0.0
  %v314 = vmax.f32 %v224, 0.0
  %v315 = vmax.f32 %v227, 0.0
  %v316 = vmax.f32 %v232, 0.0
  %v317 = vmax.f32 %v235, 0.0
  %v318 = vmax.f32 %v240, 0.0
  %v319 = vmax.f32 %v243, 0.0
  %v320 = vmax.f32 %v248, 0.0
  %v321 = vmax.f32 %v251, 0.0
  %v322 = vmax.f32 %v256, 0.0
  %v323 = vmax.f32 %v259, 0.0
  %v324 = vmax.f32 %v264, 0.0
  %v325 = vmax.f32 %v267, 0.0
  %v326 = vmax.f32 %v272, 0.0
  %v327 = vmax.f32 %v275, 0.0
  %v328 = vmax.f32 %v280, 0.0
  %v329 = vmax.f32 %v283, 0.0
  %v330 = vmax.f32 %v288, 0.0
  %v331 = vmax.f32 %v291, 0.0
  %v332 = vmax.f32 %v296, 0.0
  %v333 = vmax.f32 %v299, 0.0
  %v334 = vpack.c.bf16 %v303, %v302
  %v335 = vpack.c.bf16 %v305, %v304
  %v336 = vpack.c.bf16 %v307, %v306
  %v337 = vpack.c.bf16 %v309, %v308
  %v338 = vpack.c.bf16 %v311, %v310
  %v339 = vpack.c.bf16 %v313, %v312
  %v340 = vpack.c.bf16 %v315, %v314
  %v341 = vpack.c.bf16 %v317, %v316
  %v342 = vpack.c.bf16 %v319, %v318
  %v343 = vpack.c.bf16 %v321, %v320
  %v344 = vpack.c.bf16 %v323, %v322
  %v345 = vpack.c.bf16 %v325, %v324
  %v346 = vpack.c.bf16 %v327, %v326
  %v347 = vpack.c.bf16 %v329, %v328
  %v348 = vpack.c.bf16 %v331, %v330
  %v349 = vpack.c.bf16 %v333, %v332
  %v350 = vld [vmem:[%s3] sm:$0xf]
  %v351 = vld [vmem:[%s3 + $0x4] sm:$0xf]
  %v352 = vld [vmem:[%s3 + $0x8] sm:$0xf]
  %v353 = vld [vmem:[%s3 + $0xc] sm:$0xf]
  %v354 = vld [vmem:[%s3 + $0x10] sm:$0xf]
  %v355 = vld [vmem:[%s3 + $0x14] sm:$0xf]
  %v356 = vld [vmem:[%s3 + $0x18] sm:$0xf]
  %v357 = vld [vmem:[%s3 + $0x1c] sm:$0xf]
  %v358 = vld [vmem:[%s3 + $0x20] sm:$0xf]
  %v359 = vld [vmem:[%s3 + $0x24] sm:$0xf]
  %v360 = vld [vmem:[%s3 + $0x28] sm:$0xf]
  %v361 = vld [vmem:[%s3 + $0x2c] sm:$0xf]
  %v362 = vld [vmem:[%s3 + $0x30] sm:$0xf]
  %v363 = vld [vmem:[%s3 + $0x34] sm:$0xf]
  %v364 = vld [vmem:[%s3 + $0x38] sm:$0xf]
  %v365 = vld [vmem:[%s3 + $0x3c] sm:$0xf]
  %v366 = vld [vmem:[%s4] sm:$0x1]
  %v368 = vlaneseq
  %v369 = vshrl.u32 %v368, 7
  %v370 = vsub.s32 0, %v369
  %v371 = vrot.slane %v366, %v370
  %v389 = vunpack.c.l.b16 %v350
  %v390 = vunpack.c.l.b16 %v351
  %v391 = vunpack.c.l.b16 %v352
  %v392 = vunpack.c.l.b16 %v353
  %v393 = vunpack.c.l.b16 %v354
  %v394 = vunpack.c.l.b16 %v355
  %v395 = vunpack.c.l.b16 %v356
  %v396 = vunpack.c.l.b16 %v357
  %v397 = vunpack.c.l.b16 %v358
  %v398 = vunpack.c.l.b16 %v359
  %v399 = vunpack.c.l.b16 %v360
  %v400 = vunpack.c.l.b16 %v361
  %v401 = vunpack.c.l.b16 %v362
  %v402 = vunpack.c.l.b16 %v363
  %v403 = vunpack.c.l.b16 %v364
  %v404 = vunpack.c.l.b16 %v365
  %v405 = vpack.c.b16 %v390, %v389
  %v406 = vpack.c.b16 %v392, %v391
  %v407 = vpack.c.b16 %v394, %v393
  %v408 = vpack.c.b16 %v396, %v395
  %v409 = vpack.c.b16 %v398, %v397
  %v410 = vpack.c.b16 %v400, %v399
  %v411 = vpack.c.b16 %v402, %v401
  %v412 = vpack.c.b16 %v404, %v403
  %421 = vmatprep.subr.bf16.mxu0 0
  %422 = vmatpush1.bf16.msra.mxu0 %v405
  %423 = vmatprep.subr.bf16.mxu0 0
  %424 = vmatpush1.bf16.msra.mxu0 %v406
  %425 = vmatprep.subr.bf16.mxu0 0
  %426 = vmatpush1.bf16.msra.mxu0 %v407
  %427 = vmatprep.subr.bf16.mxu0 0
  %428 = vmatpush1.bf16.msra.mxu0 %v408
  %429 = vmatprep.subr.bf16.mxu0 0
  %430 = vmatpush1.bf16.msra.mxu0 %v409
  %431 = vmatprep.subr.bf16.mxu0 0
  %432 = vmatpush1.bf16.msra.mxu0 %v410
  %433 = vmatprep.subr.bf16.mxu0 0
  %434 = vmatpush1.bf16.msra.mxu0 %v411
  %435 = vmatprep.subr.bf16.mxu0 0
  %436 = vmatpush1.bf16.msra.mxu0 %v412
  %437 = vmatprep.subr.bf16.mxu0 0
  %438 = vmatpush1.bf16.msra.mxu0 0
  %439 = vmatprep.subr.bf16.mxu0 0
  %440 = vmatpush1.bf16.msra.mxu0 0
  %441 = vmatprep.subr.bf16.mxu0 0
  %442 = vmatpush1.bf16.msra.mxu0 0
  %443 = vmatprep.subr.bf16.mxu0 0
  %444 = vmatpush1.bf16.msra.mxu0 0
  %445 = vmatprep.subr.bf16.mxu0 0
  %446 = vmatpush1.bf16.msra.mxu0 0
  %447 = vmatprep.subr.bf16.mxu0 0
  %448 = vmatpush1.bf16.msra.mxu0 0
  %449 = vmatprep.subr.bf16.mxu0 0
  %450 = vmatpush1.bf16.msra.mxu0 0
  %451 = vmatprep.subr.bf16.mxu0 0
  %452 = vmatpush1.bf16.msra.mxu0 0
  %453 = vmatprep.mubr.bf16.mxu0 0
  %454 = vmatmul.mubr.bf16.gmra.mrb[0].mxu0 %v334
  %v455 = vpop.f32.mrb[0].mxu0
  %v456 = vadd.f32 %v371, %v455
  %v457 = vpop.f32.mrb[0].mxu0
  %v458 = vpop.f32.mrb[0].mxu0
  %v459 = vadd.f32 %v371, %v458
  %v460 = vpop.f32.mrb[0].mxu0
  %461 = vmatprep.mubr.bf16.mxu0 0
  %462 = vmatmul.mubr.bf16.gmra.mrb[0].mxu0 %v335
  %v463 = vpop.f32.mrb[0].mxu0
  %v464 = vadd.f32 %v371, %v463
  %v465 = vpop.f32.mrb[0].mxu0
  %v466 = vpop.f32.mrb[0].mxu0
  %v467 = vadd.f32 %v371, %v466
  %v468 = vpop.f32.mrb[0].mxu0
  %469 = vmatprep.mubr.bf16.mxu0 0
  %470 = vmatmul.mubr.bf16.gmra.mrb[0].mxu0 %v336
  %v471 = vpop.f32.mrb[0].mxu0
  %v472 = vadd.f32 %v371, %v471
  %v473 = vpop.f32.mrb[0].mxu0
  %v474 = vpop.f32.mrb[0].mxu0
  %v475 = vadd.f32 %v371, %v474
  %v476 = vpop.f32.mrb[0].mxu0
  %477 = vmatprep.mubr.bf16.mxu0 0
  %478 = vmatmul.mubr.bf16.gmra.mrb[0].mxu0 %v337
  %v479 = vpop.f32.mrb[0].mxu0
  %v480 = vadd.f32 %v371, %v479
  %v481 = vpop.f32.mrb[0].mxu0
  %v482 = vpop.f32.mrb[0].mxu0
  %v483 = vadd.f32 %v371, %v482
  %v484 = vpop.f32.mrb[0].mxu0
  %485 = vmatprep.mubr.bf16.mxu0 0
  %486 = vmatmul.mubr.bf16.gmra.mrb[0].mxu0 %v338
  %v487 = vpop.f32.mrb[0].mxu0
  %v488 = vadd.f32 %v371, %v487
  %v489 = vpop.f32.mrb[0].mxu0
  %v490 = vpop.f32.mrb[0].mxu0
  %v491 = vadd.f32 %v371, %v490
  %v492 = vpop.f32.mrb[0].mxu0
  %493 = vmatprep.mubr.bf16.mxu0 0
  %494 = vmatmul.mubr.bf16.gmra.mrb[0].mxu0 %v339
  %v495 = vpop.f32.mrb[0].mxu0
  %v496 = vadd.f32 %v371, %v495
  %v497 = vpop.f32.mrb[0].mxu0
  %v498 = vpop.f32.mrb[0].mxu0
  %v499 = vadd.f32 %v371, %v498
  %v500 = vpop.f32.mrb[0].mxu0
  %501 = vmatprep.mubr.bf16.mxu0 0
  %502 = vmatmul.mubr.bf16.gmra.mrb[0].mxu0 %v340
  %v503 = vpop.f32.mrb[0].mxu0
  %v504 = vadd.f32 %v371, %v503
  %v505 = vpop.f32.mrb[0].mxu0
  %v506 = vpop.f32.mrb[0].mxu0
  %v507 = vadd.f32 %v371, %v506
  %v508 = vpop.f32.mrb[0].mxu0
  %509 = vmatprep.mubr.bf16.mxu0 0
  %510 = vmatmul.mubr.bf16.gmra.mrb[0].mxu0 %v341
  %v511 = vpop.f32.mrb[0].mxu0
  %v512 = vadd.f32 %v371, %v511
  %v513 = vpop.f32.mrb[0].mxu0
  %v514 = vpop.f32.mrb[0].mxu0
  %v515 = vadd.f32 %v371, %v514
  %v516 = vpop.f32.mrb[0].mxu0
  %517 = vmatprep.mubr.bf16.mxu0 0
  %518 = vmatmul.mubr.bf16.gmra.mrb[0].mxu0 %v342
  %v519 = vpop.f32.mrb[0].mxu0
  %v520 = vadd.f32 %v371, %v519
  %v521 = vpop.f32.mrb[0].mxu0
  %v522 = vpop.f32.mrb[0].mxu0
  %v523 = vadd.f32 %v371, %v522
  %v524 = vpop.f32.mrb[0].mxu0
  %525 = vmatprep.mubr.bf16.mxu0 0
  %526 = vmatmul.mubr.bf16.gmra.mrb[0].mxu0 %v343
  %v527 = vpop.f32.mrb[0].mxu0
  %v528 = vadd.f32 %v371, %v527
  %v529 = vpop.f32.mrb[0].mxu0
  %v530 = vpop.f32.mrb[0].mxu0
  %v531 = vadd.f32 %v371, %v530
  %v532 = vpop.f32.mrb[0].mxu0
  %533 = vmatprep.mubr.bf16.mxu0 0
  %534 = vmatmul.mubr.bf16.gmra.mrb[0].mxu0 %v344
  %v535 = vpop.f32.mrb[0].mxu0
  %v536 = vadd.f32 %v371, %v535
  %v537 = vpop.f32.mrb[0].mxu0
  %v538 = vpop.f32.mrb[0].mxu0
  %v539 = vadd.f32 %v371, %v538
  %v540 = vpop.f32.mrb[0].mxu0
  %541 = vmatprep.mubr.bf16.mxu0 0
  %542 = vmatmul.mubr.bf16.gmra.mrb[0].mxu0 %v345
  %v543 = vpop.f32.mrb[0].mxu0
  %v544 = vadd.f32 %v371, %v543
  %v545 = vpop.f32.mrb[0].mxu0
  %v546 = vpop.f32.mrb[0].mxu0
  %v547 = vadd.f32 %v371, %v546
  %v548 = vpop.f32.mrb[0].mxu0
  %549 = vmatprep.mubr.bf16.mxu0 0
  %550 = vmatmul.mubr.bf16.gmra.mrb[0].mxu0 %v346
  %v551 = vpop.f32.mrb[0].mxu0
  %v552 = vadd.f32 %v371, %v551
  %v553 = vpop.f32.mrb[0].mxu0
  %v554 = vpop.f32.mrb[0].mxu0
  %v555 = vadd.f32 %v371, %v554
  %v556 = vpop.f32.mrb[0].mxu0
  %557 = vmatprep.mubr.bf16.mxu0 0
  %558 = vmatmul.mubr.bf16.gmra.mrb[0].mxu0 %v347
  %v559 = vpop.f32.mrb[0].mxu0
  %v560 = vadd.f32 %v371, %v559
  %v561 = vpop.f32.mrb[0].mxu0
  %v562 = vpop.f32.mrb[0].mxu0
  %v563 = vadd.f32 %v371, %v562
  %v564 = vpop.f32.mrb[0].mxu0
  %565 = vmatprep.mubr.bf16.mxu0 0
  %566 = vmatmul.mubr.bf16.gmra.mrb[0].mxu0 %v348
  %v567 = vpop.f32.mrb[0].mxu0
  %v568 = vadd.f32 %v371, %v567
  %v569 = vpop.f32.mrb[0].mxu0
  %v570 = vpop.f32.mrb[0].mxu0
  %v571 = vadd.f32 %v371, %v570
  %v572 = vpop.f32.mrb[0].mxu0
  %573 = vmatprep.mubr.bf16.mxu0 0
  %574 = vmatmul.mubr.bf16.gmra.mrb[0].mxu0 %v349
  %v575 = vpop.f32.mrb[0].mxu0
  %v576 = vadd.f32 %v371, %v575
  %v577 = vpop.f32.mrb[0].mxu0
  %v578 = vpop.f32.mrb[0].mxu0
  %v579 = vadd.f32 %v371, %v578
  %v580 = vpop.f32.mrb[0].mxu0
  %581 = vdwg.mxu0
  %v582 = vxor.u32 %v456, 2147483648
  %v583 = vxor.u32 %v459, 2147483648
  %v584 = vxor.u32 %v464, 2147483648
  %v585 = vxor.u32 %v467, 2147483648
  %v586 = vxor.u32 %v472, 2147483648
  %v587 = vxor.u32 %v475, 2147483648
  %v588 = vxor.u32 %v480, 2147483648
  %v589 = vxor.u32 %v483, 2147483648
  %v590 = vxor.u32 %v488, 2147483648
  %v591 = vxor.u32 %v491, 2147483648
  %v592 = vxor.u32 %v496, 2147483648
  %v593 = vxor.u32 %v499, 2147483648
  %v594 = vxor.u32 %v504, 2147483648
  %v595 = vxor.u32 %v507, 2147483648
  %v596 = vxor.u32 %v512, 2147483648
  %v597 = vxor.u32 %v515, 2147483648
  %v598 = vxor.u32 %v520, 2147483648
  %v599 = vxor.u32 %v523, 2147483648
  %v600 = vxor.u32 %v528, 2147483648
  %v601 = vxor.u32 %v531, 2147483648
  %v602 = vxor.u32 %v536, 2147483648
  %v603 = vxor.u32 %v539, 2147483648
  %v604 = vxor.u32 %v544, 2147483648
  %v605 = vxor.u32 %v547, 2147483648
  %v606 = vxor.u32 %v552, 2147483648
  %v607 = vxor.u32 %v555, 2147483648
  %v608 = vxor.u32 %v560, 2147483648
  %v609 = vxor.u32 %v563, 2147483648
  %v610 = vxor.u32 %v568, 2147483648
  %v611 = vxor.u32 %v571, 2147483648
  %v612 = vxor.u32 %v576, 2147483648
  %v613 = vxor.u32 %v579, 2147483648
  %v614 = vmul.f32 %v582, 1.442695
  %v615 = vpow.pop %v614
  %v616 = vmul.f32 %v583, 1.442695
  %v617 = vpow.pop %v616
  %v618 = vmul.f32 %v584, 1.442695
  %v619 = vpow.pop %v618
  %v620 = vmul.f32 %v585, 1.442695
  %v621 = vpow.pop %v620
  %v622 = vmul.f32 %v586, 1.442695
  %v623 = vpow.pop %v622
  %v624 = vmul.f32 %v587, 1.442695
  %v625 = vpow.pop %v624
  %v626 = vmul.f32 %v588, 1.442695
  %v627 = vpow.pop %v626
  %v628 = vmul.f32 %v589, 1.442695
  %v629 = vpow.pop %v628
  %v630 = vmul.f32 %v590, 1.442695
  %v631 = vpow.pop %v630
  %v632 = vmul.f32 %v591, 1.442695
  %v633 = vpow.pop %v632
  %v634 = vmul.f32 %v592, 1.442695
  %v635 = vpow.pop %v634
  %v636 = vmul.f32 %v593, 1.442695
  %v637 = vpow.pop %v636
  %v638 = vmul.f32 %v594, 1.442695
  %v639 = vpow.pop %v638
  %v640 = vmul.f32 %v595, 1.442695
  %v641 = vpow.pop %v640
  %v642 = vmul.f32 %v596, 1.442695
  %v643 = vpow.pop %v642
  %v644 = vmul.f32 %v597, 1.442695
  %v645 = vpow.pop %v644
  %v646 = vmul.f32 %v598, 1.442695
  %v647 = vpow.pop %v646
  %v648 = vmul.f32 %v599, 1.442695
  %v649 = vpow.pop %v648
  %v650 = vmul.f32 %v600, 1.442695
  %v651 = vpow.pop %v650
  %v652 = vmul.f32 %v601, 1.442695
  %v653 = vpow.pop %v652
  %v654 = vmul.f32 %v602, 1.442695
  %v655 = vpow.pop %v654
  %v656 = vmul.f32 %v603, 1.442695
  %v657 = vpow.pop %v656
  %v658 = vmul.f32 %v604, 1.442695
  %v659 = vpow.pop %v658
  %v660 = vmul.f32 %v605, 1.442695
  %v661 = vpow.pop %v660
  %v662 = vmul.f32 %v606, 1.442695
  %v663 = vpow.pop %v662
  %v664 = vmul.f32 %v607, 1.442695
  %v665 = vpow.pop %v664
  %v666 = vmul.f32 %v608, 1.442695
  %v667 = vpow.pop %v666
  %v668 = vmul.f32 %v609, 1.442695
  %v669 = vpow.pop %v668
  %v670 = vmul.f32 %v610, 1.442695
  %v671 = vpow.pop %v670
  %v672 = vmul.f32 %v611, 1.442695
  %v673 = vpow.pop %v672
  %v674 = vmul.f32 %v612, 1.442695
  %v675 = vpow.pop %v674
  %v676 = vmul.f32 %v613, 1.442695
  %v677 = vpow.pop %v676
  %v678 = vadd.f32 %v615, 1.0
  %v679 = vadd.f32 %v617, 1.0
  %v680 = vadd.f32 %v619, 1.0
  %v681 = vadd.f32 %v621, 1.0
  %v682 = vadd.f32 %v623, 1.0
  %v683 = vadd.f32 %v625, 1.0
  %v684 = vadd.f32 %v627, 1.0
  %v685 = vadd.f32 %v629, 1.0
  %v686 = vadd.f32 %v631, 1.0
  %v687 = vadd.f32 %v633, 1.0
  %v688 = vadd.f32 %v635, 1.0
  %v689 = vadd.f32 %v637, 1.0
  %v690 = vadd.f32 %v639, 1.0
  %v691 = vadd.f32 %v641, 1.0
  %v692 = vadd.f32 %v643, 1.0
  %v693 = vadd.f32 %v645, 1.0
  %v694 = vadd.f32 %v647, 1.0
  %v695 = vadd.f32 %v649, 1.0
  %v696 = vadd.f32 %v651, 1.0
  %v697 = vadd.f32 %v653, 1.0
  %v698 = vadd.f32 %v655, 1.0
  %v699 = vadd.f32 %v657, 1.0
  %v700 = vadd.f32 %v659, 1.0
  %v701 = vadd.f32 %v661, 1.0
  %v702 = vadd.f32 %v663, 1.0
  %v703 = vadd.f32 %v665, 1.0
  %v704 = vadd.f32 %v667, 1.0
  %v705 = vadd.f32 %v669, 1.0
  %v706 = vadd.f32 %v671, 1.0
  %v707 = vadd.f32 %v673, 1.0
  %v708 = vadd.f32 %v675, 1.0
  %v709 = vadd.f32 %v677, 1.0
  %v710 = vrcp.pop %v678
  %v711 = vmul.f32 1.0, %v710
  %v712 = vrcp.pop %v679
  %v713 = vmul.f32 1.0, %v712
  %v714 = vrcp.pop %v680
  %v715 = vmul.f32 1.0, %v714
  %v716 = vrcp.pop %v681
  %v717 = vmul.f32 1.0, %v716
  %v718 = vrcp.pop %v682
  %v719 = vmul.f32 1.0, %v718
  %v720 = vrcp.pop %v683
  %v721 = vmul.f32 1.0, %v720
  %v722 = vrcp.pop %v684
  %v723 = vmul.f32 1.0, %v722
  %v724 = vrcp.pop %v685
  %v725 = vmul.f32 1.0, %v724
  %v726 = vrcp.pop %v686
  %v727 = vmul.f32 1.0, %v726
  %v728 = vrcp.pop %v687
  %v729 = vmul.f32 1.0, %v728
  %v730 = vrcp.pop %v688
  %v731 = vmul.f32 1.0, %v730
  %v732 = vrcp.pop %v689
  %v733 = vmul.f32 1.0, %v732
  %v734 = vrcp.pop %v690
  %v735 = vmul.f32 1.0, %v734
  %v736 = vrcp.pop %v691
  %v737 = vmul.f32 1.0, %v736
  %v738 = vrcp.pop %v692
  %v739 = vmul.f32 1.0, %v738
  %v740 = vrcp.pop %v693
  %v741 = vmul.f32 1.0, %v740
  %v742 = vrcp.pop %v694
  %v743 = vmul.f32 1.0, %v742
  %v744 = vrcp.pop %v695
  %v745 = vmul.f32 1.0, %v744
  %v746 = vrcp.pop %v696
  %v747 = vmul.f32 1.0, %v746
  %v748 = vrcp.pop %v697
  %v749 = vmul.f32 1.0, %v748
  %v750 = vrcp.pop %v698
  %v751 = vmul.f32 1.0, %v750
  %v752 = vrcp.pop %v699
  %v753 = vmul.f32 1.0, %v752
  %v754 = vrcp.pop %v700
  %v755 = vmul.f32 1.0, %v754
  %v756 = vrcp.pop %v701
  %v757 = vmul.f32 1.0, %v756
  %v758 = vrcp.pop %v702
  %v759 = vmul.f32 1.0, %v758
  %v760 = vrcp.pop %v703
  %v761 = vmul.f32 1.0, %v760
  %v762 = vrcp.pop %v704
  %v763 = vmul.f32 1.0, %v762
  %v764 = vrcp.pop %v705
  %v765 = vmul.f32 1.0, %v764
  %v766 = vrcp.pop %v706
  %v767 = vmul.f32 1.0, %v766
  %v768 = vrcp.pop %v707
  %v769 = vmul.f32 1.0, %v768
  %v770 = vrcp.pop %v708
  %v771 = vmul.f32 1.0, %v770
  %v772 = vrcp.pop %v709
  %v773 = vmul.f32 1.0, %v772
  %vm774 = vcmask 523264
  %775 = vst.msk [vmem:[%s5] sm:$0xff] %vm774, %v711
  %776 = vst.msk [vmem:[%s5 + $0x8] sm:$0xff] %vm774, %v713
  %777 = vst.msk [vmem:[%s5 + $0x10] sm:$0xff] %vm774, %v715
  %778 = vst.msk [vmem:[%s5 + $0x18] sm:$0xff] %vm774, %v717
  %779 = vst.msk [vmem:[%s5 + $0x20] sm:$0xff] %vm774, %v719
  %780 = vst.msk [vmem:[%s5 + $0x28] sm:$0xff] %vm774, %v721
  %781 = vst.msk [vmem:[%s5 + $0x30] sm:$0xff] %vm774, %v723
  %782 = vst.msk [vmem:[%s5 + $0x38] sm:$0xff] %vm774, %v725
  %783 = vst.msk [vmem:[%s5 + $0x40] sm:$0xff] %vm774, %v727
  %784 = vst.msk [vmem:[%s5 + $0x48] sm:$0xff] %vm774, %v729
  %785 = vst.msk [vmem:[%s5 + $0x50] sm:$0xff] %vm774, %v731
  %786 = vst.msk [vmem:[%s5 + $0x58] sm:$0xff] %vm774, %v733
  %787 = vst.msk [vmem:[%s5 + $0x60] sm:$0xff] %vm774, %v735
  %788 = vst.msk [vmem:[%s5 + $0x68] sm:$0xff] %vm774, %v737
  %789 = vst.msk [vmem:[%s5 + $0x70] sm:$0xff] %vm774, %v739
  %790 = vst.msk [vmem:[%s5 + $0x78] sm:$0xff] %vm774, %v741
  %791 = vst.msk [vmem:[%s5 + $0x80] sm:$0xff] %vm774, %v743
  %792 = vst.msk [vmem:[%s5 + $0x88] sm:$0xff] %vm774, %v745
  %793 = vst.msk [vmem:[%s5 + $0x90] sm:$0xff] %vm774, %v747
  %794 = vst.msk [vmem:[%s5 + $0x98] sm:$0xff] %vm774, %v749
  %795 = vst.msk [vmem:[%s5 + $0xa0] sm:$0xff] %vm774, %v751
  %796 = vst.msk [vmem:[%s5 + $0xa8] sm:$0xff] %vm774, %v753
  %797 = vst.msk [vmem:[%s5 + $0xb0] sm:$0xff] %vm774, %v755
  %798 = vst.msk [vmem:[%s5 + $0xb8] sm:$0xff] %vm774, %v757
  %799 = vst.msk [vmem:[%s5 + $0xc0] sm:$0xff] %vm774, %v759
  %800 = vst.msk [vmem:[%s5 + $0xc8] sm:$0xff] %vm774, %v761
  %801 = vst.msk [vmem:[%s5 + $0xd0] sm:$0xff] %vm774, %v763
  %802 = vst.msk [vmem:[%s5 + $0xd8] sm:$0xff] %vm774, %v765
  %803 = vst.msk [vmem:[%s5 + $0xe0] sm:$0xff] %vm774, %v767
  %804 = vst.msk [vmem:[%s5 + $0xe8] sm:$0xff] %vm774, %v769
  %805 = vst.msk [vmem:[%s5 + $0xf0] sm:$0xff] %vm774, %v771
  %806 = vst.msk [vmem:[%s5 + $0xf8] sm:$0xff] %vm774, %v773
  // Predicated region
  $region22: #{tpu_custom_call.1} parent=0 // pred_check
    _
  $region23: #{tpu_custom_call.1} parent=0 // pred_check_branch
    %808 = sbr.rel (0) target = $region25
  $region24: #{tpu_custom_call.1} parent=0 // pred_region
    _
  $region25: #{tpu_custom_call.1} parent=0 // pred_fallthru
    _
  // Predicated region
  $region26: #{tpu_custom_call.1} parent=0 // pred_check
    _
  $region27: #{tpu_custom_call.1} parent=0 // pred_check_branch
    %810 = sbr.rel (0) target = $region29
  $region28: #{tpu_custom_call.1} parent=0 // pred_region
    _
  $region29: #{tpu_custom_call.1} parent=0 // pred_fallthru
    _

</llo_original>
